<compile_context>
chip_gen: v6e
topology: v6e:2x2x1
jax: 0.10.0
libtpu: 0.0.40
codegen_flags: <defaults>
</compile_context>

<pallas_src>
import functools

import jax
import jax.numpy as jnp
from jax.experimental import pallas as pl
from jax.experimental.pallas import tpu as pltpu


def _round_up(x, m):
    return ((x + m - 1) // m) * m


def corr2d_kernel(x_ref, w_ref, b_ref, o_ref, *, kh, kw, tile_oh):
    """One output-row tile of 2-D cross-correlation + bias.

    x_ref: (1, tih_pad, w_pad) VMEM  -- input rows for this tile (incl. halo)
    w_ref: (kh*kw,)            SMEM  -- flattened kernel weights
    b_ref: (1,)                SMEM  -- bias
    o_ref: (1, tile_oh, w_pad) VMEM  -- lane-dense (128-multiple) output tile
    """
    xt = x_ref[0]                       # (tih_pad, w_pad), float32
    w_pad = xt.shape[-1]

    # Hoist all scalar SMEM reads out of the vector work.
    ws = [w_ref[i] for i in range(kh * kw)]
    bias = b_ref[0]

    # Fold the bias into the accumulator init (single broadcast).
    acc = jnp.full((tile_oh, w_pad), bias, dtype=jnp.float32)

    # Lane shifts (dj) on the XLU via roll (separate VLIW slot from the VPU
    # multiply-adds); row offsets (di) are static value slices.
    for dj in range(kw):
        xs = xt if dj == 0 else pltpu.roll(xt, shift=w_pad - dj, axis=1)
        for di in range(kh):
            acc = acc + xs[di:di + tile_oh, :] * ws[di * kw + dj]

    o_ref[0] = acc


def conv2d_forward(x, weight, bias, *, tile_oh=256):
    """Pallas wrapper matching Conv2D.forward semantics (2-D x, 2-D weight)."""
    h, w = x.shape
    kh, kw = weight.shape
    oh, ow = h - kh + 1, w - kw + 1

    w_pad = _round_up(w, 128)                      # lane-dense output slab
    tile_oh = max(8, min(_round_up(tile_oh, 8), _round_up(oh, 8)))

    # Keep double-buffered (input + output) tiles well under the scoped VMEM
    # limit (32 MiB default on v7x); leave generous headroom.
    def _tile_bytes(t):
        return 2 * 4 * w_pad * (_round_up(t + kh - 1, 8) + t)

    while tile_oh > 8 and _tile_bytes(tile_oh) > (16 << 20):
        tile_oh = max(8, _round_up(tile_oh // 2, 8))

    tih_pad = _round_up(tile_oh + kh - 1, 8)
    n_tiles = pl.cdiv(oh, tile_oh)

    # Wrapper-side layout plumbing: pad to lane/sublane-aligned shapes and
    # build per-tile haloed row windows so all BlockSpecs stay plain aligned
    # Blocked tiles (auto double-buffered by the pipeline).
    h_need = (n_tiles - 1) * tile_oh + tih_pad
    x_pad = jnp.zeros((h_need, w_pad), jnp.float32)
    x_pad = x_pad.at[:h, :w].set(x.astype(jnp.float32))
    if tih_pad == tile_oh:
        # kh == 1: no halo rows needed -> free reshape, zero duplication.
        x_halo = x_pad.reshape(n_tiles, tile_oh, w_pad)
    else:
        rows = jnp.arange(n_tiles)[:, None] * tile_oh + jnp.arange(tih_pad)[None, :]
        x_halo = x_pad[rows]                       # (n_tiles, tih_pad, w_pad)

    kernel = functools.partial(corr2d_kernel, kh=kh, kw=kw, tile_oh=tile_oh)
    y_tiles = pl.pallas_call(
        kernel,
        out_shape=jax.ShapeDtypeStruct((n_tiles, tile_oh, w_pad), jnp.float32),
        grid=(n_tiles,),
        in_specs=[
            pl.BlockSpec((1, tih_pad, w_pad), lambda i: (i, 0, 0)),     # x tile
            pl.BlockSpec(memory_space=pltpu.MemorySpace.SMEM),          # weights
            pl.BlockSpec(memory_space=pltpu.MemorySpace.SMEM),          # bias
        ],
        out_specs=pl.BlockSpec((1, tile_oh, w_pad), lambda i: (i, 0, 0)),
        compiler_params=pltpu.CompilerParams(
            dimension_semantics=("parallel",)),
    )(x_halo, weight.reshape(-1).astype(jnp.float32), bias.astype(jnp.float32))

    return y_tiles.reshape(n_tiles * tile_oh, w_pad)[:oh, :ow]


def corr2d_ref(x, k):
    """Pure-JAX reference of the PyTorch corr2d (for correctness check)."""
    kh, kw = k.shape
    oh, ow = x.shape[0] - kh + 1, x.shape[1] - kw + 1
    out = jnp.zeros((oh, ow), jnp.float32)
    for di in range(kh):
        for dj in range(kw):
            out = out + x[di:di + oh, dj:dj + ow] * k[di, dj]
    return out


if __name__ == "__main__":
    key = jax.random.PRNGKey(0)
    kx, kwt, kx2, kw2 = jax.random.split(key, 4)

    # Shapes from the chapter: X is 6x8, kernel_size = (1, 2).
    H, W = 6, 8
    kernel_size = (1, 2)
    x = jax.random.normal(kx, (H, W), dtype=jnp.float32)
    weight = jax.random.uniform(kwt, kernel_size, dtype=jnp.float32)
    bias = jnp.zeros((1,), dtype=jnp.float32)

    y = jax.block_until_ready(conv2d_forward(x, weight, bias))
    y_ref = corr2d_ref(x, weight) + bias[0]
    assert y.shape == (H - kernel_size[0] + 1, W - kernel_size[1] + 1)
    assert jnp.allclose(y, y_ref, atol=1e-5, rtol=1e-5)

    # Second (still small) case exercising the multi-tile haloed grid path.
    H2, W2, ks2 = 40, 72, (3, 3)
    x2 = jax.random.normal(kx2, (H2, W2), dtype=jnp.float32)
    w2 = jax.random.uniform(kw2, ks2, dtype=jnp.float32)
    b2 = jnp.array([0.25], dtype=jnp.float32)
    y2 = jax.block_until_ready(conv2d_forward(x2, w2, b2, tile_oh=16))
    y2_ref = corr2d_ref(x2, w2) + b2[0]
    assert y2.shape == (H2 - ks2[0] + 1, W2 - ks2[1] + 1)
    assert jnp.allclose(y2, y2_ref, atol=1e-4, rtol=1e-4)

    print("KERNEL_OK")
</pallas_src>

<mosaic_0001>
module attributes {stable_mosaic.version = 11 : i64} {
  func.func @corr2d_kernel(%arg0: i32, %arg1: memref<1x8x128xf32, #tpu.memory_space<vmem>>, %arg2: memref<2xf32, #tpu.memory_space<smem>>, %arg3: memref<1xf32, #tpu.memory_space<smem>>, %arg4: memref<1x8x128xf32, #tpu.memory_space<vmem>>) attributes {dimension_semantics = [#tpu.dimension_semantics<parallel>], iteration_bounds = array<i64: 1>, scalar_prefetch = 0 : i64, scratch_operands = 0 : i64, tpu.core_type = #tpu.core_type<tc>, window_params = [{transform_indices = @transform_0, window_bounds = array<i64: 1, 8, 128>}, {transform_indices = @transform_1, window_bounds = array<i64: 2>}, {transform_indices = @transform_2, window_bounds = array<i64: 1>}, {transform_indices = @transform_3, window_bounds = array<i64: 1, 8, 128>}]} {
    %c0 = arith.constant 0 : index
    %c0_0 = arith.constant 0 : index
    %c0_1 = arith.constant 0 : index
    %0 = vector.load %arg1[%c0, %c0_0, %c0_1] : memref<1x8x128xf32, #tpu.memory_space<vmem>>, vector<1x8x128xf32>
    %1 = vector.shape_cast %0 : vector<1x8x128xf32> to vector<8x128xf32>
    %c0_2 = arith.constant 0 : index
    %2 = memref.load %arg2[%c0_2] : memref<2xf32, #tpu.memory_space<smem>>
    %c1 = arith.constant 1 : index
    %3 = memref.load %arg2[%c1] : memref<2xf32, #tpu.memory_space<smem>>
    %c0_3 = arith.constant 0 : index
    %4 = memref.load %arg3[%c0_3] : memref<1xf32, #tpu.memory_space<smem>>
    %5 = vector.broadcast %4 : f32 to vector<8x128xf32>
    %6 = vector.broadcast %2 : f32 to vector<8x128xf32>
    %7 = arith.mulf %1, %6 : vector<8x128xf32>
    %8 = arith.addf %5, %7 : vector<8x128xf32>
    %c127_i32 = arith.constant 127 : i32
    %9 = tpu.dynamic_rotate %1 by %c127_i32 dim 1 : vector<8x128xf32>, i32 -> vector<8x128xf32>
    %10 = vector.broadcast %3 : f32 to vector<8x128xf32>
    %11 = arith.mulf %9, %10 : vector<8x128xf32>
    %12 = arith.addf %8, %11 : vector<8x128xf32>
    %c0_4 = arith.constant 0 : index
    %c0_5 = arith.constant 0 : index
    %c0_6 = arith.constant 0 : index
    %13 = vector.load %arg4[%c0_4, %c0_5, %c0_6] : memref<1x8x128xf32, #tpu.memory_space<vmem>>, vector<1x8x128xf32>
    %14 = vector.shape_cast %13 : vector<1x8x128xf32> to vector<8x128xf32>
    %15 = vector.shape_cast %12 : vector<8x128xf32> to vector<1x8x128xf32>
    tpu.vector_store %arg4[%c0_4, %c0_5, %c0_6], %15 {strides = array<i32>} : memref<1x8x128xf32, #tpu.memory_space<vmem>>, vector<1x8x128xf32>,
    return
  }
  func.func @transform_0(%arg0: i32) -> (i32, i32, i32) {
    %c0_i32 = arith.constant 0 : i32
    %c0_i32_0 = arith.constant 0 : i32
    %c0_i32_1 = arith.constant 0 : i32
    return %arg0, %c0_i32, %c0_i32_0 : i32, i32, i32
  }
  func.func @transform_1(%arg0: i32) -> i32 {
    %c0_i32 = arith.constant 0 : i32
    %c0_i32_0 = arith.constant 0 : i32
    return %c0_i32 : i32
  }
  func.func @transform_2(%arg0: i32) -> i32 {
    %c0_i32 = arith.constant 0 : i32
    %c0_i32_0 = arith.constant 0 : i32
    return %c0_i32 : i32
  }
  func.func @transform_3(%arg0: i32) -> (i32, i32, i32) {
    %c0_i32 = arith.constant 0 : i32
    %c0_i32_0 = arith.constant 0 : i32
    %c0_i32_1 = arith.constant 0 : i32
    return %arg0, %c0_i32, %c0_i32_0 : i32, i32, i32
  }
}

</mosaic_0001>

<llo_original>
// kernel: tpu_custom_call.1
$region0: #{tpu_custom_call.1}
  #allocation0 [shape = 'u32[]', space=smem, size = 0x4, offset = 0x4, fixed_abs, tag = 'smem constant byte address 0x4 - core index']
  #allocation1 [shape = 'u32[144,128]{1,0:T(1,128)}', space=vmem, size = 0x12000, scoped, tag = 'internal scratch']
  #allocation2 [shape = 'f32[1]{0:T(128)S(6)}', space=smem, size = 0x200, scoped, tag = 'scoped memory for tpu_custom_call.1']
  %s0 = inlined_call_operand.hbm [shape: f32[1,8,128], index: 0, kind: input, shape index: {}]
  %s1 = inlined_call_operand.vmem [shape: f32[2], index: 1, kind: input, shape index: {}]
  %s2 = inlined_call_operand.<no memory space> [shape: f32[1], index: 2, kind: input, shape index: {}]
  %s3 = inlined_call_operand.hbm [shape: f32[1,8,128], index: 3, kind: output, shape index: {}]
  %s4 = sld [smem:[#allocation0]]
  $region30: #{tpu_custom_call.1} parent=0
    _
  %s6 = ssub.s32 1, %s4
  %s7 = scalar_select 0, %s6, %s4
  %8 = sst [smem:[#allocation2]] %s2
  $region1: #{tpu_custom_call.1} parent=0
    #allocation3 [shape = 'u8[4096]{0}', space=vmem, size = 0x1000, scoped, tag = 'input window, operand 0, single buffered']
    #allocation4 [shape = 's32[1]{0}', space=sflag, size = 0x4, scoped, tag = 'scoped memory for tpu_custom_call.1']
    #allocation5 [shape = 's32[1]{0}', space=sflag, size = 0x4, scoped, tag = 'scoped memory for tpu_custom_call.1']
    #allocation6 [shape = 's32[1]{0}', space=sflag, size = 0x4, scoped, tag = 'scoped memory for tpu_custom_call.1']
    #allocation7 [shape = 'u8[512]{0}', space=smem, size = 0x200, scoped, tag = 'input window, operand 1, single buffered']
    #allocation8 [shape = 'u8[4096]{0}', space=vmem, size = 0x1000, scoped, tag = 'output window, operand 0, single buffered']
    %9 = vsyncpa [#allocation4], 0
    %10 = vsyncpa [#allocation6], 0
    %11 = vsyncpa [#allocation5], 0
    // Predicated region
    $region2: #{tpu_custom_call.1} parent=1 // pred_check
      _
    $region3: #{tpu_custom_call.1} parent=1 // pred_check_branch
      %13 = sbr.rel (0) target = $region5
    $region4: #{tpu_custom_call.1} parent=1 // pred_region
      %s15 = ssub.s32 128, 128
      %16 = vsyncadd [#allocation4], %s15
      %s18 = sshll.u32 [#allocation3], 4
      %s19 = int_to_ptr.vmem [resolvable:$true] %s18
      %21 = dma.hbm_to_vmem [thread:$0]  %s0, 128, %s19, [#allocation4]
    $region5: #{tpu_custom_call.1} parent=1 // pred_fallthru
      _
    // Predicated region
    $region6: #{tpu_custom_call.1} parent=1 // pred_check
      _
    $region7: #{tpu_custom_call.1} parent=1 // pred_check_branch
      %23 = sbr.rel (0) target = $region9
    $region8: #{tpu_custom_call.1} parent=1 // pred_region
      %s25 = ssub.s32 16, 16
      %26 = vsyncadd [#allocation6], %s25
      %s28 = sshll.u32 %s1, 4
      %s29 = int_to_ptr.vmem [resolvable:$true] %s28
      %31 = dma.vmem_to_smem %s29, 16, [#allocation7], [#allocation6]
    $region9: #{tpu_custom_call.1} parent=1 // pred_fallthru
      _
    // Predicated region
    $region10: #{tpu_custom_call.1} parent=1 // pred_check
      _
    $region11: #{tpu_custom_call.1} parent=1 // pred_check_branch
      %33 = sbr.rel (0) target = $region13
    $region12: #{tpu_custom_call.1} parent=1 // pred_region
      _
    $region13: #{tpu_custom_call.1} parent=1 // pred_fallthru
      _
    // Predicated region
    $region14: #{tpu_custom_call.1} parent=1 // pred_check
      _
    $region15: #{tpu_custom_call.1} parent=1 // pred_check_branch
      %35 = sbr.rel (0) target = $region17
    $region16: #{tpu_custom_call.1} parent=1 // pred_region
      %36 = dma.done [#allocation4], 128
    $region17: #{tpu_custom_call.1} parent=1 // pred_fallthru
      _
    // Predicated region
    $region18: #{tpu_custom_call.1} parent=1 // pred_check
      _
    $region19: #{tpu_custom_call.1} parent=1 // pred_check_branch
      %38 = sbr.rel (0) target = $region21
    $region20: #{tpu_custom_call.1} parent=1 // pred_region
      %39 = dma.done [#allocation6], 16
    $region21: #{tpu_custom_call.1} parent=1 // pred_fallthru
      _
    %40 = sfence
    %v41 = vld [vmem:[#allocation3] sm:$0xff]
    %s42 = sld [smem:[#allocation7]]
    %s43 = sld [smem:[#allocation7 + $0x1]]
    %s44 = sld [smem:[#allocation2]]
    %v45 = vstv %s44
    %v46 = vstv %s42
    %v47 = vmul.f32 %v41, %v46
    %v48 = vadd.f32 %v45, %v47
    %49 = vrot.lane.b32.xlu0 %v41, 127
    %v50 = vpop.permute.xlu0 %49
    %v51 = vstv %s43
    %v52 = vmul.f32 %v50, %v51
    %v53 = vadd.f32 %v48, %v52
    %54 = vst [vmem:[#allocation8] sm:$0xff] %v53
    // Predicated region
    $region22: #{tpu_custom_call.1} parent=1 // pred_check
      _
    $region23: #{tpu_custom_call.1} parent=1 // pred_check_branch
      %56 = sbr.rel (0) target = $region25
    $region24: #{tpu_custom_call.1} parent=1 // pred_region
      %s58 = ssub.s32 128, 128
      %59 = vsyncadd [#allocation5], %s58
      %s61 = sshll.u32 [#allocation8], 4
      %s62 = int_to_ptr.vmem [resolvable:$true] %s61
      %64 = dma.vmem_to_hbm [thread:$0]  %s62, 128, %s3, [#allocation5]
    $region25: #{tpu_custom_call.1} parent=1 // pred_fallthru
      _
    // Predicated region
    $region26: #{tpu_custom_call.1} parent=1 // pred_check
      _
    $region27: #{tpu_custom_call.1} parent=1 // pred_check_branch
      %66 = sbr.rel (0) target = $region29
    $region28: #{tpu_custom_call.1} parent=1 // pred_region
      %67 = dma.done [#allocation5], 128
    $region29: #{tpu_custom_call.1} parent=1 // pred_fallthru
      _
    %68 = vsyncpa [#allocation4], 1
    %69 = vsyncpa [#allocation5], 1
    %70 = vsyncpa [#allocation6], 1

</llo_original>
